<compile_context>
chip_gen: v7x
topology: tpu7x:2x2x1
jax: 0.10.0
libtpu: 0.0.40
codegen_flags: <defaults>
</compile_context>

<pallas_src>
import functools

import jax
import jax.numpy as jnp
from jax.experimental import pallas as pl
from jax.experimental.pallas import tpu as pltpu

LANE = 128
DEFAULT_TILE_B = 256


def actor_mlp_kernel(x_ref, w1_ref, b1_ref, w2_ref, b2_ref, w3_ref, b3_ref,
                     logits_ref, logp_ref, *, action_dim):
    x = x_ref[...]                                   # (TB, obs_dim) f32

    # MXU matmuls take bf16 operands, accumulate in f32.
    h1 = jnp.tanh(
        jnp.dot(x.astype(jnp.bfloat16), w1_ref[...],
                preferred_element_type=jnp.float32) + b1_ref[...]
    )
    h2 = jnp.tanh(
        jnp.dot(h1.astype(jnp.bfloat16), w2_ref[...],
                preferred_element_type=jnp.float32) + b2_ref[...]
    )
    logits = (
        jnp.dot(h2.astype(jnp.bfloat16), w3_ref[...],
                preferred_element_type=jnp.float32) + b3_ref[...]
    )                                                # (TB, pad_a) f32

    # Mask lanes beyond the true action_dim so padding cannot affect logsumexp.
    lane = jax.lax.broadcasted_iota(jnp.int32, logits.shape, 1)
    logits = jnp.where(lane < action_dim, logits, jnp.float32(-1e30))

    logits_ref[...] = logits

    # Categorical(logits=...) normalization: log_probs = logits - logsumexp.
    m = jnp.max(logits, axis=-1, keepdims=True)
    lse = m + jnp.log(jnp.sum(jnp.exp(logits - m), axis=-1, keepdims=True))
    logp_ref[...] = logits - lse


@functools.partial(jax.jit, static_argnames=("tile_b",))
def actor_forward(x, w1, b1, w2, b2, w3, b3, *, tile_b=DEFAULT_TILE_B):
    B, obs_dim = x.shape
    h1_dim = w1.shape[1]
    h2_dim = w2.shape[1]
    action_dim = w3.shape[1]

    # --- pad the action dim to a lane-dense multiple of 128 ----------------
    pad_a = max(LANE, ((action_dim + LANE - 1) // LANE) * LANE)
    w3p = jnp.zeros((h2_dim, pad_a), jnp.float32).at[:, :action_dim].set(w3)
    b3p = jnp.zeros((1, pad_a), jnp.float32).at[:, :action_dim].set(b3)

    # --- weights in bf16 (HBM traffic / MXU datapath), biases stay f32 -----
    w1b = w1.astype(jnp.bfloat16)
    w2b = w2.astype(jnp.bfloat16)
    w3b = w3p.astype(jnp.bfloat16)

    # --- pad the batch so the grid covers it with a sublane-aligned tile ---
    if B >= tile_b:
        tb = tile_b
    else:
        tb = max(8, ((B + 7) // 8) * 8)
    b_pad = ((B + tb - 1) // tb) * tb
    if b_pad != B:
        x = jnp.zeros((b_pad, obs_dim), x.dtype).at[:B].set(x)

    grid = (b_pad // tb,)

    batch_spec_in = pl.BlockSpec((tb, obs_dim), lambda i: (i, 0))
    batch_spec_out = pl.BlockSpec((tb, pad_a), lambda i: (i, 0))
    resident = lambda shape: pl.BlockSpec(shape, lambda i: (0, 0))

    flops = 2 * b_pad * (obs_dim * h1_dim + h1_dim * h2_dim + h2_dim * pad_a)
    transcendentals = b_pad * (h1_dim + h2_dim + pad_a)
    bytes_accessed = (
        b_pad * obs_dim * 4                                         # x (f32)
        + (obs_dim * h1_dim + h1_dim * h2_dim + h2_dim * pad_a) * 2  # bf16 W
        + (h1_dim + h2_dim + pad_a) * 4                              # f32 b
        + 2 * b_pad * pad_a * 4                                      # outputs
    )

    out_shapes = (
        jax.ShapeDtypeStruct((b_pad, pad_a), jnp.float32),  # raw logits
        jax.ShapeDtypeStruct((b_pad, pad_a), jnp.float32),  # normalized log-probs
    )

    logits_p, logp_p = pl.pallas_call(
        functools.partial(actor_mlp_kernel, action_dim=action_dim),
        out_shape=out_shapes,
        grid=grid,
        in_specs=[
            batch_spec_in,                     # x
            resident((obs_dim, h1_dim)),       # w1 (bf16, VMEM-resident)
            resident((1, h1_dim)),             # b1
            resident((h1_dim, h2_dim)),        # w2
            resident((1, h2_dim)),             # b2
            resident((h2_dim, pad_a)),         # w3 (padded)
            resident((1, pad_a)),              # b3 (padded)
        ],
        out_specs=(batch_spec_out, batch_spec_out),
        compiler_params=pltpu.CompilerParams(
            dimension_semantics=("parallel",),
        ),
        cost_estimate=pl.CostEstimate(
            flops=flops,
            transcendentals=transcendentals,
            bytes_accessed=bytes_accessed,
        ),
    )(x, w1b, b1, w2b, b2, w3b, b3p)

    # Strip batch + lane padding.
    return logits_p[:B, :action_dim], logp_p[:B, :action_dim]


def init_linear(key, fan_in, fan_out):
    """PyTorch nn.Linear default init: U(-1/sqrt(fan_in), 1/sqrt(fan_in))."""
    kw, kb = jax.random.split(key)
    bound = 1.0 / jnp.sqrt(jnp.float32(fan_in))
    w = jax.random.uniform(kw, (fan_in, fan_out), jnp.float32, -bound, bound)
    b = jax.random.uniform(kb, (1, fan_out), jnp.float32, -bound, bound)
    return w, b


def reference_forward(x, w1, b1, w2, b2, w3, b3):
    h1 = jnp.tanh(x @ w1 + b1)
    h2 = jnp.tanh(h1 @ w2 + b2)
    logits = h2 @ w3 + b3
    logp = logits - jax.scipy.special.logsumexp(logits, axis=-1, keepdims=True)
    return logits, logp


if __name__ == "__main__":
    # Small shapes consistent with the module (batch=2, obs_dim=16, 8 actions,
    # network_shape=[256, 256]).
    B = 2
    obs_dim = 16
    action_dim = 8
    hidden = [256, 256]

    key = jax.random.PRNGKey(0)
    k_x, k1, k2, k3 = jax.random.split(key, 4)

    x = jax.random.normal(k_x, (B, obs_dim), jnp.float32)
    w1, b1 = init_linear(k1, obs_dim, hidden[0])
    w2, b2 = init_linear(k2, hidden[0], hidden[1])
    w3, b3 = init_linear(k3, hidden[1], action_dim)

    logits, logp = actor_forward(x, w1, b1, w2, b2, w3, b3)
    jax.block_until_ready((logits, logp))

    ref_logits, ref_logp = reference_forward(x, w1, b1, w2, b2, w3, b3)
    # bf16 weights in the kernel -> loose tolerance vs. the f32 reference.
    assert jnp.allclose(logits, ref_logits, atol=5e-2, rtol=5e-2)
    assert jnp.allclose(logp, ref_logp, atol=5e-2, rtol=5e-2)
    # Internal consistency: log-probs exponentiate to a valid categorical dist.
    assert jnp.allclose(jnp.sum(jnp.exp(logp), axis=-1), 1.0, atol=1e-5)

    # Exercise the gridded / pipelined path (padding + multiple batch tiles).
    B2 = 300
    x2 = jax.random.normal(jax.random.PRNGKey(1), (B2, obs_dim), jnp.float32)
    logits2, logp2 = actor_forward(x2, w1, b1, w2, b2, w3, b3, tile_b=128)
    jax.block_until_ready((logits2, logp2))
    ref_logits2, ref_logp2 = reference_forward(x2, w1, b1, w2, b2, w3, b3)
    assert logits2.shape == (B2, action_dim)
    assert jnp.allclose(logits2, ref_logits2, atol=5e-2, rtol=5e-2)
    assert jnp.allclose(logp2, ref_logp2, atol=5e-2, rtol=5e-2)
    assert jnp.allclose(jnp.sum(jnp.exp(logp2), axis=-1), 1.0, atol=1e-5)

    # TODO(synk): Categorical .sample()/log_prob-of-sample (get_action) and the
    # Adam optimizer state are host/training behaviour, not part of the forward
    # hot path; the kernel returns the distribution parameters (logits and
    # normalized log-probs).

    print("KERNEL_OK")
</pallas_src>

<mosaic_0001>
module attributes {stable_mosaic.version = 11 : i64} {
  func.func @actor_mlp_kernel(%arg0: i32, %arg1: memref<8x16xf32, #tpu.memory_space<vmem>>, %arg2: memref<16x256xbf16, #tpu.memory_space<vmem>>, %arg3: memref<1x256xf32, #tpu.memory_space<vmem>>, %arg4: memref<256x256xbf16, #tpu.memory_space<vmem>>, %arg5: memref<1x256xf32, #tpu.memory_space<vmem>>, %arg6: memref<256x128xbf16, #tpu.memory_space<vmem>>, %arg7: memref<1x128xf32, #tpu.memory_space<vmem>>, %arg8: memref<8x128xf32, #tpu.memory_space<vmem>>, %arg9: memref<8x128xf32, #tpu.memory_space<vmem>>) attributes {dimension_semantics = [#tpu.dimension_semantics<parallel>], iteration_bounds = array<i64: 1>, scalar_prefetch = 0 : i64, scratch_operands = 0 : i64, tpu.core_type = #tpu.core_type<tc>, window_params = [{transform_indices = @transform_0, window_bounds = array<i64: 8, 16>}, {pipeline_mode = #tpu.pipeline_mode<synchronous>, transform_indices = @transform_1, window_bounds = array<i64: 16, 256>}, {pipeline_mode = #tpu.pipeline_mode<synchronous>, transform_indices = @transform_2, window_bounds = array<i64: 1, 256>}, {pipeline_mode = #tpu.pipeline_mode<synchronous>, transform_indices = @transform_3, window_bounds = array<i64: 256, 256>}, {pipeline_mode = #tpu.pipeline_mode<synchronous>, transform_indices = @transform_4, window_bounds = array<i64: 1, 256>}, {pipeline_mode = #tpu.pipeline_mode<synchronous>, transform_indices = @transform_5, window_bounds = array<i64: 256, 128>}, {pipeline_mode = #tpu.pipeline_mode<synchronous>, transform_indices = @transform_6, window_bounds = array<i64: 1, 128>}, {transform_indices = @transform_7, window_bounds = array<i64: 8, 128>}, {transform_indices = @transform_8, window_bounds = array<i64: 8, 128>}]} {
    %c0 = arith.constant 0 : index
    %c0_0 = arith.constant 0 : index
    %0 = vector.load %arg1[%c0, %c0_0] : memref<8x16xf32, #tpu.memory_space<vmem>>, vector<8x16xf32>
    %1 = arith.truncf %0 : vector<8x16xf32> to vector<8x16xbf16>
    %c0_1 = arith.constant 0 : index
    %c0_2 = arith.constant 0 : index
    %2 = vector.load %arg2[%c0_1, %c0_2] : memref<16x256xbf16, #tpu.memory_space<vmem>>, vector<16x256xbf16>
    %cst = arith.constant dense<0.000000e+00> : vector<8x256xf32>
    %3 = tpu.matmul %1, %2, %cst {dimension_numbers = #tpu.dot_dimension_numbers<[1], [0], [0], [1], [0, 0, 1, 1], [], []>} : vector<8x16xbf16>, vector<16x256xbf16>, vector<8x256xf32> -> vector<8x256xf32>
    %c0_3 = arith.constant 0 : index
    %c0_4 = arith.constant 0 : index
    %4 = vector.load %arg3[%c0_3, %c0_4] : memref<1x256xf32, #tpu.memory_space<vmem>>, vector<1x256xf32>
    %5 = vector.broadcast %4 : vector<1x256xf32> to vector<8x256xf32>
    %6 = arith.addf %3, %5 : vector<8x256xf32>
    %7 = math.tanh %6 : vector<8x256xf32>
    %8 = arith.truncf %7 : vector<8x256xf32> to vector<8x256xbf16>
    %c0_5 = arith.constant 0 : index
    %c0_6 = arith.constant 0 : index
    %9 = vector.load %arg4[%c0_5, %c0_6] : memref<256x256xbf16, #tpu.memory_space<vmem>>, vector<256x256xbf16>
    %cst_7 = arith.constant dense<0.000000e+00> : vector<8x256xf32>
    %10 = tpu.matmul %8, %9, %cst_7 {dimension_numbers = #tpu.dot_dimension_numbers<[1], [0], [0], [1], [0, 0, 1, 1], [], []>} : vector<8x256xbf16>, vector<256x256xbf16>, vector<8x256xf32> -> vector<8x256xf32>
    %c0_8 = arith.constant 0 : index
    %c0_9 = arith.constant 0 : index
    %11 = vector.load %arg5[%c0_8, %c0_9] : memref<1x256xf32, #tpu.memory_space<vmem>>, vector<1x256xf32>
    %12 = vector.broadcast %11 : vector<1x256xf32> to vector<8x256xf32>
    %13 = arith.addf %10, %12 : vector<8x256xf32>
    %14 = math.tanh %13 : vector<8x256xf32>
    %15 = arith.truncf %14 : vector<8x256xf32> to vector<8x256xbf16>
    %c0_10 = arith.constant 0 : index
    %c0_11 = arith.constant 0 : index
    %16 = vector.load %arg6[%c0_10, %c0_11] : memref<256x128xbf16, #tpu.memory_space<vmem>>, vector<256x128xbf16>
    %cst_12 = arith.constant dense<0.000000e+00> : vector<8x128xf32>
    %17 = tpu.matmul %15, %16, %cst_12 {dimension_numbers = #tpu.dot_dimension_numbers<[1], [0], [0], [1], [0, 0, 1, 1], [], []>} : vector<8x256xbf16>, vector<256x128xbf16>, vector<8x128xf32> -> vector<8x128xf32>
    %c0_13 = arith.constant 0 : index
    %c0_14 = arith.constant 0 : index
    %18 = vector.load %arg7[%c0_13, %c0_14] : memref<1x128xf32, #tpu.memory_space<vmem>>, vector<1x128xf32>
    %19 = vector.broadcast %18 : vector<1x128xf32> to vector<8x128xf32>
    %20 = arith.addf %17, %19 : vector<8x128xf32>
    %21 = tpu.iota {dimensions = array<i32: 1>} : vector<8x128xi32>
    %c8_i32 = arith.constant 8 : i32
    %22 = vector.broadcast %c8_i32 : i32 to vector<8x128xi32>
    %23 = arith.cmpi slt, %21, %22 : vector<8x128xi32>
    %cst_15 = arith.constant -1.000000e+30 : f32
    %24 = vector.broadcast %cst_15 : f32 to vector<8x128xf32>
    %25 = arith.select %23, %20, %24 : vector<8x128xi1>, vector<8x128xf32>
    %c0_16 = arith.constant 0 : index
    %c0_17 = arith.constant 0 : index
    %26 = vector.load %arg8[%c0_16, %c0_17] : memref<8x128xf32, #tpu.memory_space<vmem>>, vector<8x128xf32>
    tpu.vector_store %arg8[%c0_16, %c0_17], %25 {strides = array<i32>} : memref<8x128xf32, #tpu.memory_space<vmem>>, vector<8x128xf32>,
    %cst_18 = arith.constant dense<0xFF800000> : vector<8xf32>
    %27 = vector.multi_reduction <maximumf>, %25, %cst_18 [1] : vector<8x128xf32> to vector<8xf32>
    %28 = vector.shape_cast %27 : vector<8xf32> to vector<8x1xf32>
    %29 = vector.broadcast %28 : vector<8x1xf32> to vector<8x128xf32>
    %30 = arith.subf %25, %29 : vector<8x128xf32>
    %31 = math.exp %30 : vector<8x128xf32>
    %cst_19 = arith.constant dense<0.000000e+00> : vector<8xf32>
    %32 = vector.multi_reduction <add>, %31, %cst_19 [1] : vector<8x128xf32> to vector<8xf32>
    %33 = vector.shape_cast %32 : vector<8xf32> to vector<8x1xf32>
    %34 = math.log %33 : vector<8x1xf32>
    %35 = arith.addf %28, %34 : vector<8x1xf32>
    %36 = vector.broadcast %35 : vector<8x1xf32> to vector<8x128xf32>
    %37 = arith.subf %25, %36 : vector<8x128xf32>
    %c0_20 = arith.constant 0 : index
    %c0_21 = arith.constant 0 : index
    %38 = vector.load %arg9[%c0_20, %c0_21] : memref<8x128xf32, #tpu.memory_space<vmem>>, vector<8x128xf32>
    tpu.vector_store %arg9[%c0_20, %c0_21], %37 {strides = array<i32>} : memref<8x128xf32, #tpu.memory_space<vmem>>, vector<8x128xf32>,
    return
  }
  func.func @transform_0(%arg0: i32) -> (i32, i32) {
    %c0_i32 = arith.constant 0 : i32
    %c0_i32_0 = arith.constant 0 : i32
    return %arg0, %c0_i32 : i32, i32
  }
  func.func @transform_1(%arg0: i32) -> (i32, i32) {
    %c0_i32 = arith.constant 0 : i32
    %c0_i32_0 = arith.constant 0 : i32
    %c0_i32_1 = arith.constant 0 : i32
    return %c0_i32, %c0_i32_0 : i32, i32
  }
  func.func @transform_2(%arg0: i32) -> (i32, i32) {
    %c0_i32 = arith.constant 0 : i32
    %c0_i32_0 = arith.constant 0 : i32
    %c0_i32_1 = arith.constant 0 : i32
    return %c0_i32, %c0_i32_0 : i32, i32
  }
  func.func @transform_3(%arg0: i32) -> (i32, i32) {
    %c0_i32 = arith.constant 0 : i32
    %c0_i32_0 = arith.constant 0 : i32
    %c0_i32_1 = arith.constant 0 : i32
    return %c0_i32, %c0_i32_0 : i32, i32
  }
  func.func @transform_4(%arg0: i32) -> (i32, i32) {
    %c0_i32 = arith.constant 0 : i32
    %c0_i32_0 = arith.constant 0 : i32
    %c0_i32_1 = arith.constant 0 : i32
    return %c0_i32, %c0_i32_0 : i32, i32
  }
  func.func @transform_5(%arg0: i32) -> (i32, i32) {
    %c0_i32 = arith.constant 0 : i32
    %c0_i32_0 = arith.constant 0 : i32
    %c0_i32_1 = arith.constant 0 : i32
    return %c0_i32, %c0_i32_0 : i32, i32
  }
  func.func @transform_6(%arg0: i32) -> (i32, i32) {
    %c0_i32 = arith.constant 0 : i32
    %c0_i32_0 = arith.constant 0 : i32
    %c0_i32_1 = arith.constant 0 : i32
    return %c0_i32, %c0_i32_0 : i32, i32
  }
  func.func @transform_7(%arg0: i32) -> (i32, i32) {
    %c0_i32 = arith.constant 0 : i32
    %c0_i32_0 = arith.constant 0 : i32
    return %arg0, %c0_i32 : i32, i32
  }
  func.func @transform_8(%arg0: i32) -> (i32, i32) {
    %c0_i32 = arith.constant 0 : i32
    %c0_i32_0 = arith.constant 0 : i32
    return %arg0, %c0_i32 : i32, i32
  }
}

</mosaic_0001>

<llo_original>
// kernel: actor_forward.1
$region0: #{actor_forward.1}
  #allocation0 [shape = 'u32[]', space=smem, size = 0x4, offset = 0x4, fixed_abs, tag = 'smem constant byte address 0x4 - core index']
  #allocation1 [shape = 'u32[144,128]{1,0:T(1,128)}', space=vmem, size = 0x12000, scoped, tag = 'internal scratch']
  %s0 = inlined_call_operand.vmem [shape: f32[8,16], index: 0, kind: input, shape index: {}]
  %s1 = inlined_call_operand.vmem [shape: bf16[16,256], index: 1, kind: input, shape index: {}]
  %s2 = inlined_call_operand.vmem [shape: f32[1,256], index: 2, kind: input, shape index: {}]
  %s3 = inlined_call_operand.vmem [shape: bf16[256,256], index: 3, kind: input, shape index: {}]
  %s4 = inlined_call_operand.vmem [shape: f32[1,256], index: 4, kind: input, shape index: {}]
  %s5 = inlined_call_operand.vmem [shape: bf16[256,128], index: 5, kind: input, shape index: {}]
  %s6 = inlined_call_operand.vmem [shape: f32[1,128], index: 6, kind: input, shape index: {}]
  %s7 = inlined_call_operand.vmem [shape: f32[8,128], index: 7, kind: output, shape index: {0}]
  %s8 = inlined_call_operand.vmem [shape: f32[8,128], index: 8, kind: output, shape index: {1}]
  %9 = xla_tuple %s7, %s8
  %s10 = sld [smem:[#allocation0]]
  $region46: #{actor_forward.1} parent=0
    _
  %s12 = ssub.s32 1, %s10
  %s13 = scalar_select 0, %s12, %s10
  // Predicated region
  $region2: #{actor_forward.1} parent=0 // pred_check
    _
  $region3: #{actor_forward.1} parent=0 // pred_check_branch
    %15 = sbr.rel (0) target = $region5
  $region4: #{actor_forward.1} parent=0 // pred_region
    _
  $region5: #{actor_forward.1} parent=0 // pred_fallthru
    _
  // Predicated region
  $region6: #{actor_forward.1} parent=0 // pred_check
    _
  $region7: #{actor_forward.1} parent=0 // pred_check_branch
    %17 = sbr.rel (0) target = $region9
  $region8: #{actor_forward.1} parent=0 // pred_region
    _
  $region9: #{actor_forward.1} parent=0 // pred_fallthru
    _
  // Predicated region
  $region10: #{actor_forward.1} parent=0 // pred_check
    _
  $region11: #{actor_forward.1} parent=0 // pred_check_branch
    %19 = sbr.rel (0) target = $region13
  $region12: #{actor_forward.1} parent=0 // pred_region
    _
  $region13: #{actor_forward.1} parent=0 // pred_fallthru
    _
  // Predicated region
  $region14: #{actor_forward.1} parent=0 // pred_check
    _
  $region15: #{actor_forward.1} parent=0 // pred_check_branch
    %21 = sbr.rel (0) target = $region17
  $region16: #{actor_forward.1} parent=0 // pred_region
    _
  $region17: #{actor_forward.1} parent=0 // pred_fallthru
    _
  // Predicated region
  $region18: #{actor_forward.1} parent=0 // pred_check
    _
  $region19: #{actor_forward.1} parent=0 // pred_check_branch
    %23 = sbr.rel (0) target = $region21
  $region20: #{actor_forward.1} parent=0 // pred_region
    _
  $region21: #{actor_forward.1} parent=0 // pred_fallthru
    _
  // Predicated region
  $region22: #{actor_forward.1} parent=0 // pred_check
    _
  $region23: #{actor_forward.1} parent=0 // pred_check_branch
    %25 = sbr.rel (0) target = $region25
  $region24: #{actor_forward.1} parent=0 // pred_region
    _
  $region25: #{actor_forward.1} parent=0 // pred_fallthru
    _
  // Predicated region
  $region26: #{actor_forward.1} parent=0 // pred_check
    _
  $region27: #{actor_forward.1} parent=0 // pred_check_branch
    %27 = sbr.rel (0) target = $region29
  $region28: #{actor_forward.1} parent=0 // pred_region
    _
  $region29: #{actor_forward.1} parent=0 // pred_fallthru
    _
  %v29 = vld [vmem:[%s0] sm:$0xff]
  %v30 = vpack.c.bf16 %v29, %v29
  %v31 = vld [vmem:[%s1] sm:$0xff]
  %v32 = vld [vmem:[%s1 + $0x8] sm:$0xff]
  %v33 = vld [vmem:[%s2] sm:$0x3]
  %v35 = vlaneseq
  %v36 = vshrl.u32 %v35, 7
  %v37 = vsub.s32 0, %v36
  %v38 = vrot.slane %v33, %v37
  %v39 = vlaneseq
  %v40 = vshrl.u32 %v39, 7
  %v41 = vsub.s32 1, %v40
  %v42 = vrot.slane %v33, %v41
  %v47 = vunpack.c.l.b16 %v31
  %v48 = vunpack.c.h.b16 %v31
  %v49 = vunpack.c.l.b16 %v32
  %v50 = vunpack.c.h.b16 %v32
  %v51 = vpack.c.b16 %v49, %v47
  %v52 = vpack.c.b16 %v50, %v48
  %vm55 = vcmask 130048
  %v57 = vsel %vm55, %v30, 0
  %59 = vmatprep.subr.bf16.mxu0 %v52
  %60 = vmatpush1.bf16.msra.mxu0 %v51
  %61 = vmatprep.subr.bf16.mxu0 0
  %62 = vmatpush1.bf16.msra.mxu0 0
  %63 = vmatprep.subr.bf16.mxu0 0
  %64 = vmatpush1.bf16.msra.mxu0 0
  %65 = vmatprep.subr.bf16.mxu0 0
  %66 = vmatpush1.bf16.msra.mxu0 0
  %67 = vmatprep.subr.bf16.mxu0 0
  %68 = vmatpush1.bf16.msra.mxu0 0
  %69 = vmatprep.subr.bf16.mxu0 0
  %70 = vmatpush1.bf16.msra.mxu0 0
  %71 = vmatprep.subr.bf16.mxu0 0
  %72 = vmatpush1.bf16.msra.mxu0 0
  %73 = vmatprep.subr.bf16.mxu0 0
  %74 = vmatpush1.bf16.msra.mxu0 0
  %75 = vmatprep.subr.bf16.mxu0 0
  %76 = vmatpush1.bf16.msra.mxu0 0
  %77 = vmatprep.subr.bf16.mxu0 0
  %78 = vmatpush1.bf16.msra.mxu0 0
  %79 = vmatprep.subr.bf16.mxu0 0
  %80 = vmatpush1.bf16.msra.mxu0 0
  %81 = vmatprep.subr.bf16.mxu0 0
  %82 = vmatpush1.bf16.msra.mxu0 0
  %83 = vmatprep.subr.bf16.mxu0 0
  %84 = vmatpush1.bf16.msra.mxu0 0
  %85 = vmatprep.subr.bf16.mxu0 0
  %86 = vmatpush1.bf16.msra.mxu0 0
  %87 = vmatprep.subr.bf16.mxu0 0
  %88 = vmatpush1.bf16.msra.mxu0 0
  %89 = vmatprep.subr.bf16.mxu0 0
  %90 = vmatpush1.bf16.msra.mxu0 0
  %91 = vmatprep.mubr.bf16.mxu0 0
  %92 = vmatmul.mubr.bf16.gmra.mrb[0].mxu0 %v57
  %v93 = vpop.f32.mrb[0].mxu0
  %v94 = vadd.f32 %v38, %v93
  %v95 = vpop.f32.mrb[0].mxu0
  %v96 = vadd.f32 %v42, %v95
  %v97 = vpop.f32.mrb[0].mxu0
  %v98 = vpop.f32.mrb[0].mxu0
  %99 = vdwg.mxu0
  %v100 = vtanh.pop %v94
  %v101 = vtanh.pop %v96
  %v102 = vpack.c.bf16 %v100, %v100
  %v103 = vpack.c.bf16 %v101, %v101
  %v104 = vld [vmem:[%s3] sm:$0xff]
  %v105 = vld [vmem:[%s3 + $0x8] sm:$0xff]
  %v106 = vld [vmem:[%s3 + $0x10] sm:$0xff]
  %v107 = vld [vmem:[%s3 + $0x18] sm:$0xff]
  %v108 = vld [vmem:[%s3 + $0x20] sm:$0xff]
  %v109 = vld [vmem:[%s3 + $0x28] sm:$0xff]
  %v110 = vld [vmem:[%s3 + $0x30] sm:$0xff]
  %v111 = vld [vmem:[%s3 + $0x38] sm:$0xff]
  %v112 = vld [vmem:[%s3 + $0x40] sm:$0xff]
  %v113 = vld [vmem:[%s3 + $0x48] sm:$0xff]
  %v114 = vld [vmem:[%s3 + $0x50] sm:$0xff]
  %v115 = vld [vmem:[%s3 + $0x58] sm:$0xff]
  %v116 = vld [vmem:[%s3 + $0x60] sm:$0xff]
  %v117 = vld [vmem:[%s3 + $0x68] sm:$0xff]
  %v118 = vld [vmem:[%s3 + $0x70] sm:$0xff]
  %v119 = vld [vmem:[%s3 + $0x78] sm:$0xff]
  %v120 = vld [vmem:[%s3 + $0x80] sm:$0xff]
  %v121 = vld [vmem:[%s3 + $0x88] sm:$0xff]
  %v122 = vld [vmem:[%s3 + $0x90] sm:$0xff]
  %v123 = vld [vmem:[%s3 + $0x98] sm:$0xff]
  %v124 = vld [vmem:[%s3 + $0xa0] sm:$0xff]
  %v125 = vld [vmem:[%s3 + $0xa8] sm:$0xff]
  %v126 = vld [vmem:[%s3 + $0xb0] sm:$0xff]
  %v127 = vld [vmem:[%s3 + $0xb8] sm:$0xff]
  %v128 = vld [vmem:[%s3 + $0xc0] sm:$0xff]
  %v129 = vld [vmem:[%s3 + $0xc8] sm:$0xff]
  %v130 = vld [vmem:[%s3 + $0xd0] sm:$0xff]
  %v131 = vld [vmem:[%s3 + $0xd8] sm:$0xff]
  %v132 = vld [vmem:[%s3 + $0xe0] sm:$0xff]
  %v133 = vld [vmem:[%s3 + $0xe8] sm:$0xff]
  %v134 = vld [vmem:[%s3 + $0xf0] sm:$0xff]
  %v135 = vld [vmem:[%s3 + $0xf8] sm:$0xff]
  %v136 = vld [vmem:[%s4] sm:$0x3]
  %v138 = vlaneseq
  %v139 = vshrl.u32 %v138, 7
  %v140 = vsub.s32 0, %v139
  %v141 = vrot.slane %v136, %v140
  %v142 = vlaneseq
  %v143 = vshrl.u32 %v142, 7
  %v144 = vsub.s32 1, %v143
  %v145 = vrot.slane %v136, %v144
  %v180 = vunpack.c.l.b16 %v104
  %v181 = vunpack.c.h.b16 %v104
  %v182 = vunpack.c.l.b16 %v105
  %v183 = vunpack.c.h.b16 %v105
  %v184 = vunpack.c.l.b16 %v106
  %v185 = vunpack.c.h.b16 %v106
  %v186 = vunpack.c.l.b16 %v107
  %v187 = vunpack.c.h.b16 %v107
  %v188 = vunpack.c.l.b16 %v108
  %v189 = vunpack.c.h.b16 %v108
  %v190 = vunpack.c.l.b16 %v109
  %v191 = vunpack.c.h.b16 %v109
  %v192 = vunpack.c.l.b16 %v110
  %v193 = vunpack.c.h.b16 %v110
  %v194 = vunpack.c.l.b16 %v111
  %v195 = vunpack.c.h.b16 %v111
  %v196 = vunpack.c.l.b16 %v112
  %v197 = vunpack.c.h.b16 %v112
  %v198 = vunpack.c.l.b16 %v113
  %v199 = vunpack.c.h.b16 %v113
  %v200 = vunpack.c.l.b16 %v114
  %v201 = vunpack.c.h.b16 %v114
  %v202 = vunpack.c.l.b16 %v115
  %v203 = vunpack.c.h.b16 %v115
  %v204 = vunpack.c.l.b16 %v116
  %v205 = vunpack.c.h.b16 %v116
  %v206 = vunpack.c.l.b16 %v117
  %v207 = vunpack.c.h.b16 %v117
  %v208 = vunpack.c.l.b16 %v118
  %v209 = vunpack.c.h.b16 %v118
  %v210 = vunpack.c.l.b16 %v119
  %v211 = vunpack.c.h.b16 %v119
  %v212 = vunpack.c.l.b16 %v120
  %v213 = vunpack.c.h.b16 %v120
  %v214 = vunpack.c.l.b16 %v121
  %v215 = vunpack.c.h.b16 %v121
  %v216 = vunpack.c.l.b16 %v122
  %v217 = vunpack.c.h.b16 %v122
  %v218 = vunpack.c.l.b16 %v123
  %v219 = vunpack.c.h.b16 %v123
  %v220 = vunpack.c.l.b16 %v124
  %v221 = vunpack.c.h.b16 %v124
  %v222 = vunpack.c.l.b16 %v125
  %v223 = vunpack.c.h.b16 %v125
  %v224 = vunpack.c.l.b16 %v126
  %v225 = vunpack.c.h.b16 %v126
  %v226 = vunpack.c.l.b16 %v127
  %v227 = vunpack.c.h.b16 %v127
  %v228 = vunpack.c.l.b16 %v128
  %v229 = vunpack.c.h.b16 %v128
  %v230 = vunpack.c.l.b16 %v129
  %v231 = vunpack.c.h.b16 %v129
  %v232 = vunpack.c.l.b16 %v130
  %v233 = vunpack.c.h.b16 %v130
  %v234 = vunpack.c.l.b16 %v131
  %v235 = vunpack.c.h.b16 %v131
  %v236 = vunpack.c.l.b16 %v132
  %v237 = vunpack.c.h.b16 %v132
  %v238 = vunpack.c.l.b16 %v133
  %v239 = vunpack.c.h.b16 %v133
  %v240 = vunpack.c.l.b16 %v134
  %v241 = vunpack.c.h.b16 %v134
  %v242 = vunpack.c.l.b16 %v135
  %v243 = vunpack.c.h.b16 %v135
  %v244 = vpack.c.b16 %v182, %v180
  %v245 = vpack.c.b16 %v183, %v181
  %v246 = vpack.c.b16 %v186, %v184
  %v247 = vpack.c.b16 %v187, %v185
  %v248 = vpack.c.b16 %v190, %v188
  %v249 = vpack.c.b16 %v191, %v189
  %v250 = vpack.c.b16 %v194, %v192
  %v251 = vpack.c.b16 %v195, %v193
  %v252 = vpack.c.b16 %v198, %v196
  %v253 = vpack.c.b16 %v199, %v197
  %v254 = vpack.c.b16 %v202, %v200
  %v255 = vpack.c.b16 %v203, %v201
  %v256 = vpack.c.b16 %v206, %v204
  %v257 = vpack.c.b16 %v207, %v205
  %v258 = vpack.c.b16 %v210, %v208
  %v259 = vpack.c.b16 %v211, %v209
  %v260 = vpack.c.b16 %v214, %v212
  %v261 = vpack.c.b16 %v215, %v213
  %v262 = vpack.c.b16 %v218, %v216
  %v263 = vpack.c.b16 %v219, %v217
  %v264 = vpack.c.b16 %v222, %v220
  %v265 = vpack.c.b16 %v223, %v221
  %v266 = vpack.c.b16 %v226, %v224
  %v267 = vpack.c.b16 %v227, %v225
  %v268 = vpack.c.b16 %v230, %v228
  %v269 = vpack.c.b16 %v231, %v229
  %v270 = vpack.c.b16 %v234, %v232
  %v271 = vpack.c.b16 %v235, %v233
  %v272 = vpack.c.b16 %v238, %v236
  %v273 = vpack.c.b16 %v239, %v237
  %v274 = vpack.c.b16 %v242, %v240
  %v275 = vpack.c.b16 %v243, %v241
  %308 = vmatprep.subr.bf16.mxu0 %v245
  %309 = vmatpush1.bf16.msra.mxu0 %v244
  %310 = vmatprep.subr.bf16.mxu0 %v247
  %311 = vmatpush1.bf16.msra.mxu0 %v246
  %312 = vmatprep.subr.bf16.mxu0 %v249
  %313 = vmatpush1.bf16.msra.mxu0 %v248
  %314 = vmatprep.subr.bf16.mxu0 %v251
  %315 = vmatpush1.bf16.msra.mxu0 %v250
  %316 = vmatprep.subr.bf16.mxu0 %v253
  %317 = vmatpush1.bf16.msra.mxu0 %v252
  %318 = vmatprep.subr.bf16.mxu0 %v255
  %319 = vmatpush1.bf16.msra.mxu0 %v254
  %320 = vmatprep.subr.bf16.mxu0 %v257
  %321 = vmatpush1.bf16.msra.mxu0 %v256
  %322 = vmatprep.subr.bf16.mxu0 %v259
  %323 = vmatpush1.bf16.msra.mxu0 %v258
  %324 = vmatprep.subr.bf16.mxu0 %v261
  %325 = vmatpush1.bf16.msra.mxu0 %v260
  %326 = vmatprep.subr.bf16.mxu0 %v263
  %327 = vmatpush1.bf16.msra.mxu0 %v262
  %328 = vmatprep.subr.bf16.mxu0 %v265
  %329 = vmatpush1.bf16.msra.mxu0 %v264
  %330 = vmatprep.subr.bf16.mxu0 %v267
  %331 = vmatpush1.bf16.msra.mxu0 %v266
  %332 = vmatprep.subr.bf16.mxu0 %v269
  %333 = vmatpush1.bf16.msra.mxu0 %v268
  %334 = vmatprep.subr.bf16.mxu0 %v271
  %335 = vmatpush1.bf16.msra.mxu0 %v270
  %336 = vmatprep.subr.bf16.mxu0 %v273
  %337 = vmatpush1.bf16.msra.mxu0 %v272
  %338 = vmatprep.subr.bf16.mxu0 %v275
  %339 = vmatpush1.bf16.msra.mxu0 %v274
  %340 = vmatprep.mubr.bf16.mxu0 %v103
  %341 = vmatmul.mubr.bf16.gmra.mrb[0].mxu0 %v102
  %v342 = vpop.f32.mrb[0].mxu0
  %v343 = vadd.f32 %v141, %v342
  %v344 = vpop.f32.mrb[0].mxu0
  %v345 = vadd.f32 %v145, %v344
  %v346 = vpop.f32.mrb[0].mxu0
  %v347 = vpop.f32.mrb[0].mxu0
  %348 = vdwg.mxu0
  %v349 = vtanh.pop %v343
  %v350 = vtanh.pop %v345
  %v351 = vpack.c.bf16 %v349, %v349
  %v352 = vpack.c.bf16 %v350, %v350
  %v353 = vld [vmem:[%s5] sm:$0xf]
  %v354 = vld [vmem:[%s5 + $0x4] sm:$0xf]
  %v355 = vld [vmem:[%s5 + $0x8] sm:$0xf]
  %v356 = vld [vmem:[%s5 + $0xc] sm:$0xf]
  %v357 = vld [vmem:[%s5 + $0x10] sm:$0xf]
  %v358 = vld [vmem:[%s5 + $0x14] sm:$0xf]
  %v359 = vld [vmem:[%s5 + $0x18] sm:$0xf]
  %v360 = vld [vmem:[%s5 + $0x1c] sm:$0xf]
  %v361 = vld [vmem:[%s5 + $0x20] sm:$0xf]
  %v362 = vld [vmem:[%s5 + $0x24] sm:$0xf]
  %v363 = vld [vmem:[%s5 + $0x28] sm:$0xf]
  %v364 = vld [vmem:[%s5 + $0x2c] sm:$0xf]
  %v365 = vld [vmem:[%s5 + $0x30] sm:$0xf]
  %v366 = vld [vmem:[%s5 + $0x34] sm:$0xf]
  %v367 = vld [vmem:[%s5 + $0x38] sm:$0xf]
  %v368 = vld [vmem:[%s5 + $0x3c] sm:$0xf]
  %v369 = vld [vmem:[%s5 + $0x40] sm:$0xf]
  %v370 = vld [vmem:[%s5 + $0x44] sm:$0xf]
  %v371 = vld [vmem:[%s5 + $0x48] sm:$0xf]
  %v372 = vld [vmem:[%s5 + $0x4c] sm:$0xf]
  %v373 = vld [vmem:[%s5 + $0x50] sm:$0xf]
  %v374 = vld [vmem:[%s5 + $0x54] sm:$0xf]
  %v375 = vld [vmem:[%s5 + $0x58] sm:$0xf]
  %v376 = vld [vmem:[%s5 + $0x5c] sm:$0xf]
  %v377 = vld [vmem:[%s5 + $0x60] sm:$0xf]
  %v378 = vld [vmem:[%s5 + $0x64] sm:$0xf]
  %v379 = vld [vmem:[%s5 + $0x68] sm:$0xf]
  %v380 = vld [vmem:[%s5 + $0x6c] sm:$0xf]
  %v381 = vld [vmem:[%s5 + $0x70] sm:$0xf]
  %v382 = vld [vmem:[%s5 + $0x74] sm:$0xf]
  %v383 = vld [vmem:[%s5 + $0x78] sm:$0xf]
  %v384 = vld [vmem:[%s5 + $0x7c] sm:$0xf]
  %v385 = vld [vmem:[%s6] sm:$0x1]
  %v387 = vlaneseq
  %v388 = vshrl.u32 %v387, 7
  %v389 = vsub.s32 0, %v388
  %v390 = vrot.slane %v385, %v389
  %v424 = vunpack.c.l.b16 %v353
  %v425 = vunpack.c.l.b16 %v354
  %v426 = vunpack.c.l.b16 %v355
  %v427 = vunpack.c.l.b16 %v356
  %v428 = vunpack.c.l.b16 %v357
  %v429 = vunpack.c.l.b16 %v358
  %v430 = vunpack.c.l.b16 %v359
  %v431 = vunpack.c.l.b16 %v360
  %v432 = vunpack.c.l.b16 %v361
  %v433 = vunpack.c.l.b16 %v362
  %v434 = vunpack.c.l.b16 %v363
  %v435 = vunpack.c.l.b16 %v364
  %v436 = vunpack.c.l.b16 %v365
  %v437 = vunpack.c.l.b16 %v366
  %v438 = vunpack.c.l.b16 %v367
  %v439 = vunpack.c.l.b16 %v368
  %v440 = vunpack.c.l.b16 %v369
  %v441 = vunpack.c.l.b16 %v370
  %v442 = vunpack.c.l.b16 %v371
  %v443 = vunpack.c.l.b16 %v372
  %v444 = vunpack.c.l.b16 %v373
  %v445 = vunpack.c.l.b16 %v374
  %v446 = vunpack.c.l.b16 %v375
  %v447 = vunpack.c.l.b16 %v376
  %v448 = vunpack.c.l.b16 %v377
  %v449 = vunpack.c.l.b16 %v378
  %v450 = vunpack.c.l.b16 %v379
  %v451 = vunpack.c.l.b16 %v380
  %v452 = vunpack.c.l.b16 %v381
  %v453 = vunpack.c.l.b16 %v382
  %v454 = vunpack.c.l.b16 %v383
  %v455 = vunpack.c.l.b16 %v384
  %v456 = vpack.c.b16 %v425, %v424
  %v457 = vpack.c.b16 %v427, %v426
  %v458 = vpack.c.b16 %v429, %v428
  %v459 = vpack.c.b16 %v431, %v430
  %v460 = vpack.c.b16 %v433, %v432
  %v461 = vpack.c.b16 %v435, %v434
  %v462 = vpack.c.b16 %v437, %v436
  %v463 = vpack.c.b16 %v439, %v438
  %v464 = vpack.c.b16 %v441, %v440
  %v465 = vpack.c.b16 %v443, %v442
  %v466 = vpack.c.b16 %v445, %v444
  %v467 = vpack.c.b16 %v447, %v446
  %v468 = vpack.c.b16 %v449, %v448
  %v469 = vpack.c.b16 %v451, %v450
  %v470 = vpack.c.b16 %v453, %v452
  %v471 = vpack.c.b16 %v455, %v454
  %488 = vmatprep.subr.bf16.mxu0 0
  %489 = vmatpush1.bf16.msra.mxu0 %v456
  %490 = vmatprep.subr.bf16.mxu0 0
  %491 = vmatpush1.bf16.msra.mxu0 %v457
  %492 = vmatprep.subr.bf16.mxu0 0
  %493 = vmatpush1.bf16.msra.mxu0 %v458
  %494 = vmatprep.subr.bf16.mxu0 0
  %495 = vmatpush1.bf16.msra.mxu0 %v459
  %496 = vmatprep.subr.bf16.mxu0 0
  %497 = vmatpush1.bf16.msra.mxu0 %v460
  %498 = vmatprep.subr.bf16.mxu0 0
  %499 = vmatpush1.bf16.msra.mxu0 %v461
  %500 = vmatprep.subr.bf16.mxu0 0
  %501 = vmatpush1.bf16.msra.mxu0 %v462
  %502 = vmatprep.subr.bf16.mxu0 0
  %503 = vmatpush1.bf16.msra.mxu0 %v463
  %504 = vmatprep.subr.bf16.mxu0 0
  %505 = vmatpush1.bf16.msra.mxu0 %v464
  %506 = vmatprep.subr.bf16.mxu0 0
  %507 = vmatpush1.bf16.msra.mxu0 %v465
  %508 = vmatprep.subr.bf16.mxu0 0
  %509 = vmatpush1.bf16.msra.mxu0 %v466
  %510 = vmatprep.subr.bf16.mxu0 0
  %511 = vmatpush1.bf16.msra.mxu0 %v467
  %512 = vmatprep.subr.bf16.mxu0 0
  %513 = vmatpush1.bf16.msra.mxu0 %v468
  %514 = vmatprep.subr.bf16.mxu0 0
  %515 = vmatpush1.bf16.msra.mxu0 %v469
  %516 = vmatprep.subr.bf16.mxu0 0
  %517 = vmatpush1.bf16.msra.mxu0 %v470
  %518 = vmatprep.subr.bf16.mxu0 0
  %519 = vmatpush1.bf16.msra.mxu0 %v471
  %520 = vmatprep.mubr.bf16.mxu0 %v352
  %521 = vmatmul.mubr.bf16.gmra.mrb[0].mxu0 %v351
  %v522 = vpop.f32.mrb[0].mxu0
  %v523 = vadd.f32 %v390, %v522
  %v524 = vpop.f32.mrb[0].mxu0
  %v525 = vpop.f32.mrb[0].mxu0
  %v526 = vpop.f32.mrb[0].mxu0
  %527 = vdwg.mxu0
  %v528 = vlaneseq
  %v529 = vand.u32 %v528, 127
  %vm530 = vcmp.lt.s32.totalorder %v529, 8
  %v531 = vsel %vm530, %v523, -1e+30
  %532 = vst [vmem:[%s7] sm:$0xff] %v531
  %533 = vmax.xlane.f32.xlu0 %v531
  %v534 = vpop.xlane.xlu0 %533
  %v535 = vsub.f32 %v531, %v534
  %v536 = vmul.f32 %v535, 1.442695
  %v537 = vpow.pop %v536
  %538 = vadd.xlane.f32.xlu0 %v537
  %v539 = vpop.xlane.xlu0 %538
  %v540 = vlog2.pop %v539
  %v541 = vmul.f32 %v540, 0.6931472
  %v542 = vadd.f32 %v534, %v541
  %v543 = vsub.f32 %v531, %v542
  %544 = vst [vmem:[%s8] sm:$0xff] %v543
  // Predicated region
  $region30: #{actor_forward.1} parent=0 // pred_check
    _
  $region31: #{actor_forward.1} parent=0 // pred_check_branch
    %546 = sbr.rel (0) target = $region33
  $region32: #{actor_forward.1} parent=0 // pred_region
    _
  $region33: #{actor_forward.1} parent=0 // pred_fallthru
    _
  // Predicated region
  $region34: #{actor_forward.1} parent=0 // pred_check
    _
  $region35: #{actor_forward.1} parent=0 // pred_check_branch
    %548 = sbr.rel (0) target = $region37
  $region36: #{actor_forward.1} parent=0 // pred_region
    _
  $region37: #{actor_forward.1} parent=0 // pred_fallthru
    _
  // Predicated region
  $region38: #{actor_forward.1} parent=0 // pred_check
    _
  $region39: #{actor_forward.1} parent=0 // pred_check_branch
    %550 = sbr.rel (0) target = $region41
  $region40: #{actor_forward.1} parent=0 // pred_region
    _
  $region41: #{actor_forward.1} parent=0 // pred_fallthru
    _
  // Predicated region
  $region42: #{actor_forward.1} parent=0 // pred_check
    _
  $region43: #{actor_forward.1} parent=0 // pred_check_branch
    %552 = sbr.rel (0) target = $region45
  $region44: #{actor_forward.1} parent=0 // pred_region
    _
  $region45: #{actor_forward.1} parent=0 // pred_fallthru
    _

</llo_original>
